<compile_context>
chip_gen: v6e
topology: v6e:2x2x1
jax: 0.10.0
libtpu: 0.0.40
codegen_flags: <defaults>
</compile_context>

<pallas_src>
import jax
import jax.numpy as jnp
from jax.experimental import pallas as pl
from jax.experimental.pallas import tpu as pltpu


def _round_up(x, m):
    return ((x + m - 1) // m) * m


def _ceil_div(a, b):
    return -(-a // b)


def albert_head_kernel(ids_ref, emb_hbm, wp_ref, bp_ref, w12_ref, b12_ref,
                       out_ref, cls_buf, sem):
    """Fused CLS-row gather + ALBERT pooler (dense+tanh) + folded classifier head.

    ids_ref : [Bpad]      int32  SMEM (scalar-prefetched CLS token ids)
    emb_hbm : [vocab, H]  f32    HBM (memory_space=pl.ANY, gathered via DMA)
    wp_ref  : [H, H]      bf16   pooler weight (pre-transposed [in, out])
    bp_ref  : [1, H]      f32    pooler bias
    w12_ref : [H, Cpad]   bf16   folded W1 @ W2, zero-padded to lane width
    b12_ref : [1, Cpad]   f32    folded b1 @ W2 + b2, zero-padded
    out_ref : [tb, Cpad]  f32    logits tile (lane-dense, unmasked stores)
    cls_buf : [tb, H]     f32    VMEM scratch for gathered CLS rows
    sem     : DMA semaphore (shared by the per-row gather copies)
    """
    i = pl.program_id(0)
    tb = cls_buf.shape[0]
    base = i * tb

    # Data-dependent CLS embedding gather: only tb rows cross HBM->VMEM,
    # the embedding table itself never leaves HBM.
    @pl.loop(0, tb)
    def _(r):
        tok = ids_ref[base + r]
        pltpu.make_async_copy(emb_hbm.at[pl.ds(tok, 1), :],
                              cls_buf.at[pl.ds(r, 1), :], sem).start()

    @pl.loop(0, tb)
    def _(r):
        # All row copies have identical byte counts, so tb same-shaped waits
        # retire all tb outstanding copies on the shared semaphore.
        pltpu.make_async_copy(emb_hbm.at[pl.ds(0, 1), :],
                              cls_buf.at[pl.ds(0, 1), :], sem).wait()

    x = cls_buf[...].astype(jnp.bfloat16)                               # [tb, H]

    # ALBERT pooler: tanh(x @ Wp + bp); f32 accumulation on the MXU.
    pooled = jnp.tanh(
        jnp.dot(x, wp_ref[...], preferred_element_type=jnp.float32)
        + bp_ref[...])                                                  # [tb, H] f32

    # Eval-mode dropout = identity -> fc2(fc1(.)) pre-folded into one affine map.
    logits = (jnp.dot(pooled.astype(w12_ref.dtype), w12_ref[...],
                      preferred_element_type=jnp.float32)
              + b12_ref[...])                                           # [tb, Cpad]

    out_ref[...] = logits.astype(out_ref.dtype)


def _vmem_limit_bytes(need_bytes):
    """Generation-aware VMEM limit: physical capacity minus ~15% headroom."""
    try:
        cap = getattr(pltpu.get_tpu_info(), "vmem_capacity_bytes", None)
    except Exception:
        cap = None
    if not cap:
        cap = 64 << 20                      # conservative default (v7x per-TC VMEM)
    ceiling = int(cap * 0.85)               # leave room for Mosaic internal scratch
    return int(min(max(need_bytes, 16 << 20), ceiling))


def albert_classifier_head(cls_ids, emb, wp_bf16, bp_f32, w12_pad, b12_pad):
    """cls_ids: [B] int32; emb: [vocab, H] f32. Returns padded logits [Bpad, Cpad] f32."""
    B = cls_ids.shape[0]
    H = emb.shape[1]
    Cpad = w12_pad.shape[1]

    # Batch tile: bound padding waste (ceil split over <=256-row tiles, rounded to
    # 16-row sublane packing); 256 keeps the 256-wide MXU M dim full on v6e/v7x.
    # TODO(synk): cap tb at 128 on v5e (4x128x128 MXU).
    tb_cap = 256
    n_tiles = max(1, _ceil_div(B, tb_cap))
    tb = _round_up(_ceil_div(B, n_tiles), 16)
    # Ensure >= 2 grid steps when feasible so v7x's two TensorCores both get work.
    # TODO(synk): make this split v7x-only (single-TC chips pay one extra grid step).
    if _round_up(B, tb) == tb and tb >= 32:
        tb = _round_up(_ceil_div(tb, 2), 16)
    Bpad = _round_up(B, tb)
    nb = Bpad // tb

    ids_pad = jnp.pad(cls_ids.astype(jnp.int32), (0, Bpad - B))  # pad rows gather row 0

    # Advisory cost estimate (pooler + folded head matmuls, tanh transcendentals).
    flops = 2 * Bpad * H * H + 2 * Bpad * H * Cpad
    bytes_accessed = (Bpad * H * 4           # gathered CLS rows (f32)
                      + H * H * 2            # wp (bf16)
                      + H * Cpad * 2         # w12 (bf16)
                      + (H + Cpad) * 4       # biases (f32)
                      + Bpad * 4             # token ids
                      + Bpad * Cpad * 4)     # output (f32)
    cost = pl.CostEstimate(flops=flops, transcendentals=Bpad * H,
                           bytes_accessed=bytes_accessed)

    def run(single_buffer_weights):
        # Constant-index weight blocks never change across the batch grid; single
        # buffering halves their resident VMEM (matters at large H / on v7x).
        kw = {"pipeline_mode": pl.Buffered(1)} if single_buffer_weights else {}
        const = lambda i, ids: (0, 0)
        in_specs = [
            pl.BlockSpec(memory_space=pl.ANY),               # embedding stays in HBM
            pl.BlockSpec((H, H), const, **kw),               # wp   (VMEM-resident)
            pl.BlockSpec((1, H), const, **kw),               # bp
            pl.BlockSpec((H, Cpad), const, **kw),            # w12  (VMEM-resident)
            pl.BlockSpec((1, Cpad), const, **kw),            # b12
        ]
        weight_bytes = (H * H + H * Cpad) * 2 + (H + Cpad) * 4
        act_bytes = tb * H * 4 + 2 * tb * Cpad * 4           # cls scratch + out (2-deep)
        vmem_need = ((1 if single_buffer_weights else 2) * weight_bytes
                     + act_bytes + (1 << 20))

        return pl.pallas_call(
            albert_head_kernel,
            out_shape=jax.ShapeDtypeStruct((Bpad, Cpad), jnp.float32),
            grid_spec=pltpu.PrefetchScalarGridSpec(
                num_scalar_prefetch=1,
                grid=(nb,),
                in_specs=in_specs,
                out_specs=pl.BlockSpec((tb, Cpad), lambda i, ids: (i, 0)),
                scratch_shapes=[pltpu.VMEM((tb, H), jnp.float32),
                                pltpu.SemaphoreType.DMA],
            ),
            compiler_params=pltpu.CompilerParams(
                dimension_semantics=("parallel",),
                vmem_limit_bytes=_vmem_limit_bytes(vmem_need)),
            cost_estimate=cost,
        )(ids_pad, emb, wp_bf16, bp_f32, w12_pad, b12_pad)

    try:
        return run(True)
    except Exception:
        # Fallback for jax versions without single-buffered pipeline_mode support.
        return run(False)


def fold_classifier_params(params):
    """One-time (model-load) weight prep: fc1.fc2 fold (eval dropout = identity),
    bf16 casts for the MXU, lane-dense padding of the class dim. NOT per-call."""
    H = params["wp"].shape[0]
    C = params["w2"].shape[1]
    Cpad = _round_up(C, 128)
    w12 = params["w1"] @ params["w2"]                       # [H, C]  exact in f32
    b12 = params["b1"] @ params["w2"] + params["b2"]        # [1, C]
    return {
        "embedding": params["embedding"].astype(jnp.float32),
        "wp": params["wp"].astype(jnp.bfloat16),
        "bp": params["bp"].astype(jnp.float32).reshape(1, H),
        "w12": jnp.pad(w12.astype(jnp.bfloat16), ((0, 0), (0, Cpad - C))),
        "b12": jnp.pad(b12.astype(jnp.float32), ((0, 0), (0, Cpad - C))),
        "num_class": C,
    }


def albert_classifier_forward(token_ids, folded):
    """Forward with pre-folded weights: the CLS row gather, pooler and classifier
    head all run inside one pallas_call."""
    B = token_ids.shape[0]
    cls_ids = token_ids[:, 0]
    logits_pad = albert_classifier_head(cls_ids, folded["embedding"],
                                        folded["wp"], folded["bp"],
                                        folded["w12"], folded["b12"])
    return logits_pad[:B, :folded["num_class"]]


def init_params(key, vocab_size, hidden_size, num_class):
    ks = jax.random.split(key, 7)
    scale = 0.02
    # PyTorch Linear weights are [out, in]; stored pre-transposed [in, out].
    return {
        "embedding": scale * jax.random.normal(ks[0], (vocab_size, hidden_size),
                                               jnp.float32),
        "wp": scale * jax.random.normal(ks[1], (hidden_size, hidden_size),
                                        jnp.float32),
        "bp": scale * jax.random.normal(ks[2], (1, hidden_size), jnp.float32),
        "w1": scale * jax.random.normal(ks[3], (hidden_size, hidden_size),
                                        jnp.float32),
        "b1": scale * jax.random.normal(ks[4], (1, hidden_size), jnp.float32),
        "w2": scale * jax.random.normal(ks[5], (hidden_size, num_class),
                                        jnp.float32),
        "b2": scale * jax.random.normal(ks[6], (1, num_class), jnp.float32),
    }


if __name__ == "__main__":
    B, S, H, VOCAB, NUM_CLASS = 8, 16, 128, 64, 8

    key = jax.random.PRNGKey(0)
    k_params, k_tok = jax.random.split(key)
    params = init_params(k_params, VOCAB, H, NUM_CLASS)
    token_ids = jax.random.randint(k_tok, (B, S), 0, VOCAB, dtype=jnp.int32)

    # One-time weight preparation (hoisted out of the per-call forward path).
    folded = fold_classifier_params(params)

    logits = albert_classifier_forward(token_ids, folded)
    logits = jax.block_until_ready(logits)

    # Pure-JAX f32 reference (un-folded fc1 -> fc2, eval-mode dropout = identity).
    cls_ref = jnp.take(params["embedding"], token_ids[:, 0], axis=0)
    pooled_ref = jnp.tanh(cls_ref @ params["wp"] + params["bp"])
    ref = (pooled_ref @ params["w1"] + params["b1"]) @ params["w2"] + params["b2"]

    assert logits.shape == (B, NUM_CLASS)
    # bf16 weights/activations with f32 accumulation -> slightly looser tolerance.
    assert jnp.allclose(logits, ref, atol=2e-3, rtol=2e-3)

    print("KERNEL_OK")
</pallas_src>

<mosaic_0001>
module attributes {stable_mosaic.version = 11 : i64} {
  func.func @albert_head_kernel(%arg0: i32, %arg1: memref<16xi32, #tpu.memory_space<smem>>, %arg2: memref<64x128xf32, #tpu.memory_space<any>>, %arg3: memref<128x128xbf16, #tpu.memory_space<vmem>>, %arg4: memref<1x128xf32, #tpu.memory_space<vmem>>, %arg5: memref<128x128xbf16, #tpu.memory_space<vmem>>, %arg6: memref<1x128xf32, #tpu.memory_space<vmem>>, %arg7: memref<16x128xf32, #tpu.memory_space<vmem>>, %arg8: memref<16x128xf32, #tpu.memory_space<vmem>>, %arg9: memref<!tpu.dma_semaphore, #tpu.memory_space<semaphore_mem>>) attributes {dimension_semantics = [#tpu.dimension_semantics<parallel>], iteration_bounds = array<i64: 1>, scalar_prefetch = 1 : i64, scratch_operands = 2 : i64, tpu.core_type = #tpu.core_type<tc>, window_params = [{}, {pipeline_mode = #tpu.pipeline_mode<synchronous>, transform_indices = @transform_1, window_bounds = array<i64: 128, 128>}, {pipeline_mode = #tpu.pipeline_mode<synchronous>, transform_indices = @transform_2, window_bounds = array<i64: 1, 128>}, {pipeline_mode = #tpu.pipeline_mode<synchronous>, transform_indices = @transform_3, window_bounds = array<i64: 128, 128>}, {pipeline_mode = #tpu.pipeline_mode<synchronous>, transform_indices = @transform_4, window_bounds = array<i64: 1, 128>}, {transform_indices = @transform_5, window_bounds = array<i64: 16, 128>}]} {
    %c16_i32 = arith.constant 16 : i32
    %0 = arith.muli %arg0, %c16_i32 : i32
    %c0_i32 = arith.constant 0 : i32
    %c16_i32_0 = arith.constant 16 : i32
    %1 = arith.addi %c0_i32, %c16_i32_0 : i32
    %c1_i32 = arith.constant 1 : i32
    scf.for %arg10 = %c0_i32 to %1 step %c1_i32  : i32 {
      %c1_i32_17 = arith.constant 1 : i32
      %18 = arith.muli %arg10, %c1_i32_17 : i32
      %c0_i32_18 = arith.constant 0 : i32
      %19 = arith.addi %c0_i32_18, %18 : i32
      %20 = arith.addi %0, %19 : i32
      %21 = arith.index_cast %20 : i32 to index
      %22 = memref.load %arg1[%21] : memref<16xi32, #tpu.memory_space<smem>>
      %c0_i32_19 = arith.constant 0 : i32
      %23 = tpu.memref_slice %arg2[%22, %c0_i32_19] : memref<64x128xf32, #tpu.memory_space<any>> -> memref<1x128xf32, #tpu.memory_space<any>>
      %c0_i32_20 = arith.constant 0 : i32
      %24 = tpu.memref_slice %arg8[%19, %c0_i32_20] : memref<16x128xf32, #tpu.memory_space<vmem>> -> memref<1x128xf32, #tpu.memory_space<vmem>>
      tpu.enqueue_dma source(%23 : memref<1x128xf32, #tpu.memory_space<any>>) target(%24 : memref<1x128xf32, #tpu.memory_space<vmem>>) target_semaphore(%arg9 : memref<!tpu.dma_semaphore, #tpu.memory_space<semaphore_mem>>)
    }
    %c16_i32_1 = arith.constant 16 : i32
    %c0_i32_2 = arith.constant 0 : i32
    %c16_i32_3 = arith.constant 16 : i32
    %2 = arith.addi %c0_i32_2, %c16_i32_3 : i32
    %c1_i32_4 = arith.constant 1 : i32
    scf.for %arg10 = %c0_i32_2 to %2 step %c1_i32_4  : i32 {
      %c0_i32_17 = arith.constant 0 : i32
      %c0_i32_18 = arith.constant 0 : i32
      %18 = tpu.memref_slice %arg2[%c0_i32_17, %c0_i32_18] : memref<64x128xf32, #tpu.memory_space<any>> -> memref<1x128xf32, #tpu.memory_space<any>>
      %c0_i32_19 = arith.constant 0 : i32
      %c0_i32_20 = arith.constant 0 : i32
      %19 = tpu.memref_slice %arg8[%c0_i32_19, %c0_i32_20] : memref<16x128xf32, #tpu.memory_space<vmem>> -> memref<1x128xf32, #tpu.memory_space<vmem>>
      tpu.wait_dma2 semaphore(%arg9 : memref<!tpu.dma_semaphore, #tpu.memory_space<semaphore_mem>>) src(%18 : memref<1x128xf32, #tpu.memory_space<any>>) dst(%19 : memref<1x128xf32, #tpu.memory_space<vmem>>)
    }
    %c0 = arith.constant 0 : index
    %c0_5 = arith.constant 0 : index
    %3 = vector.load %arg8[%c0, %c0_5] : memref<16x128xf32, #tpu.memory_space<vmem>>, vector<16x128xf32>
    %4 = arith.truncf %3 : vector<16x128xf32> to vector<16x128xbf16>
    %c0_6 = arith.constant 0 : index
    %c0_7 = arith.constant 0 : index
    %5 = vector.load %arg3[%c0_6, %c0_7] : memref<128x128xbf16, #tpu.memory_space<vmem>>, vector<128x128xbf16>
    %cst = arith.constant dense<0.000000e+00> : vector<16x128xf32>
    %6 = tpu.matmul %4, %5, %cst {dimension_numbers = #tpu.dot_dimension_numbers<[1], [0], [0], [1], [0, 0, 1, 1], [], []>} : vector<16x128xbf16>, vector<128x128xbf16>, vector<16x128xf32> -> vector<16x128xf32>
    %c0_8 = arith.constant 0 : index
    %c0_9 = arith.constant 0 : index
    %7 = vector.load %arg4[%c0_8, %c0_9] : memref<1x128xf32, #tpu.memory_space<vmem>>, vector<1x128xf32>
    %8 = vector.broadcast %7 : vector<1x128xf32> to vector<16x128xf32>
    %9 = arith.addf %6, %8 : vector<16x128xf32>
    %10 = math.tanh %9 : vector<16x128xf32>
    %11 = arith.truncf %10 : vector<16x128xf32> to vector<16x128xbf16>
    %c0_10 = arith.constant 0 : index
    %c0_11 = arith.constant 0 : index
    %12 = vector.load %arg5[%c0_10, %c0_11] : memref<128x128xbf16, #tpu.memory_space<vmem>>, vector<128x128xbf16>
    %cst_12 = arith.constant dense<0.000000e+00> : vector<16x128xf32>
    %13 = tpu.matmul %11, %12, %cst_12 {dimension_numbers = #tpu.dot_dimension_numbers<[1], [0], [0], [1], [0, 0, 1, 1], [], []>} : vector<16x128xbf16>, vector<128x128xbf16>, vector<16x128xf32> -> vector<16x128xf32>
    %c0_13 = arith.constant 0 : index
    %c0_14 = arith.constant 0 : index
    %14 = vector.load %arg6[%c0_13, %c0_14] : memref<1x128xf32, #tpu.memory_space<vmem>>, vector<1x128xf32>
    %15 = vector.broadcast %14 : vector<1x128xf32> to vector<16x128xf32>
    %16 = arith.addf %13, %15 : vector<16x128xf32>
    %c0_15 = arith.constant 0 : index
    %c0_16 = arith.constant 0 : index
    %17 = vector.load %arg7[%c0_15, %c0_16] : memref<16x128xf32, #tpu.memory_space<vmem>>, vector<16x128xf32>
    tpu.vector_store %arg7[%c0_15, %c0_16], %16 {strides = array<i32>} : memref<16x128xf32, #tpu.memory_space<vmem>>, vector<16x128xf32>,
    return
  }
  func.func @transform_1(%arg0: i32, %arg1: memref<16xi32, #tpu.memory_space<smem>>) -> (i32, i32) {
    %c0_i32 = arith.constant 0 : i32
    %c0_i32_0 = arith.constant 0 : i32
    %c0_i32_1 = arith.constant 0 : i32
    return %c0_i32, %c0_i32_0 : i32, i32
  }
  func.func @transform_2(%arg0: i32, %arg1: memref<16xi32, #tpu.memory_space<smem>>) -> (i32, i32) {
    %c0_i32 = arith.constant 0 : i32
    %c0_i32_0 = arith.constant 0 : i32
    %c0_i32_1 = arith.constant 0 : i32
    return %c0_i32, %c0_i32_0 : i32, i32
  }
  func.func @transform_3(%arg0: i32, %arg1: memref<16xi32, #tpu.memory_space<smem>>) -> (i32, i32) {
    %c0_i32 = arith.constant 0 : i32
    %c0_i32_0 = arith.constant 0 : i32
    %c0_i32_1 = arith.constant 0 : i32
    return %c0_i32, %c0_i32_0 : i32, i32
  }
  func.func @transform_4(%arg0: i32, %arg1: memref<16xi32, #tpu.memory_space<smem>>) -> (i32, i32) {
    %c0_i32 = arith.constant 0 : i32
    %c0_i32_0 = arith.constant 0 : i32
    %c0_i32_1 = arith.constant 0 : i32
    return %c0_i32, %c0_i32_0 : i32, i32
  }
  func.func @transform_5(%arg0: i32, %arg1: memref<16xi32, #tpu.memory_space<smem>>) -> (i32, i32) {
    %c0_i32 = arith.constant 0 : i32
    %c0_i32_0 = arith.constant 0 : i32
    return %arg0, %c0_i32 : i32, i32
  }
}

module attributes {stable_mosaic.version = 11 : i64} {
  func.func @albert_head_kernel(%arg0: i32, %arg1: memref<16xi32, #tpu.memory_space<smem>>, %arg2: memref<64x128xf32, #tpu.memory_space<any>>, %arg3: memref<128x128xbf16, #tpu.memory_space<vmem>>, %arg4: memref<1x128xf32, #tpu.memory_space<vmem>>, %arg5: memref<128x128xbf16, #tpu.memory_space<vmem>>, %arg6: memref<1x128xf32, #tpu.memory_space<vmem>>, %arg7: memref<16x128xf32, #tpu.memory_space<vmem>>, %arg8: memref<16x128xf32, #tpu.memory_space<vmem>>, %arg9: memref<!tpu.dma_semaphore, #tpu.memory_space<semaphore_mem>>) attributes {dimension_semantics = [#tpu.dimension_semantics<parallel>], iteration_bounds = array<i64: 1>, scalar_prefetch = 1 : i64, scratch_operands = 2 : i64, tpu.core_type = #tpu.core_type<tc>, window_params = [{}, {pipeline_mode = #tpu.pipeline_mode<synchronous>, transform_indices = @transform_1, window_bounds = array<i64: 128, 128>}, {pipeline_mode = #tpu.pipeline_mode<synchronous>, transform_indices = @transform_2, window_bounds = array<i64: 1, 128>}, {pipeline_mode = #tpu.pipeline_mode<synchronous>, transform_indices = @transform_3, window_bounds = array<i64: 128, 128>}, {pipeline_mode = #tpu.pipeline_mode<synchronous>, transform_indices = @transform_4, window_bounds = array<i64: 1, 128>}, {transform_indices = @transform_5, window_bounds = array<i64: 16, 128>}]} {
    %c16_i32 = arith.constant 16 : i32
    %0 = arith.muli %arg0, %c16_i32 : i32
    %c0_i32 = arith.constant 0 : i32
    %c16_i32_0 = arith.constant 16 : i32
    %1 = arith.addi %c0_i32, %c16_i32_0 : i32
    %c1_i32 = arith.constant 1 : i32
    scf.for %arg10 = %c0_i32 to %1 step %c1_i32  : i32 {
      %c1_i32_17 = arith.constant 1 : i32
      %18 = arith.muli %arg10, %c1_i32_17 : i32
      %c0_i32_18 = arith.constant 0 : i32
      %19 = arith.addi %c0_i32_18, %18 : i32
      %20 = arith.addi %0, %19 : i32
      %21 = arith.index_cast %20 : i32 to index
      %22 = memref.load %arg1[%21] : memref<16xi32, #tpu.memory_space<smem>>
      %c0_i32_19 = arith.constant 0 : i32
      %23 = tpu.memref_slice %arg2[%22, %c0_i32_19] : memref<64x128xf32, #tpu.memory_space<any>> -> memref<1x128xf32, #tpu.memory_space<any>>
      %c0_i32_20 = arith.constant 0 : i32
      %24 = tpu.memref_slice %arg8[%19, %c0_i32_20] : memref<16x128xf32, #tpu.memory_space<vmem>> -> memref<1x128xf32, #tpu.memory_space<vmem>>
      tpu.enqueue_dma source(%23 : memref<1x128xf32, #tpu.memory_space<any>>) target(%24 : memref<1x128xf32, #tpu.memory_space<vmem>>) target_semaphore(%arg9 : memref<!tpu.dma_semaphore, #tpu.memory_space<semaphore_mem>>)
    }
    %c16_i32_1 = arith.constant 16 : i32
    %c0_i32_2 = arith.constant 0 : i32
    %c16_i32_3 = arith.constant 16 : i32
    %2 = arith.addi %c0_i32_2, %c16_i32_3 : i32
    %c1_i32_4 = arith.constant 1 : i32
    scf.for %arg10 = %c0_i32_2 to %2 step %c1_i32_4  : i32 {
      %c0_i32_17 = arith.constant 0 : i32
      %c0_i32_18 = arith.constant 0 : i32
      %18 = tpu.memref_slice %arg2[%c0_i32_17, %c0_i32_18] : memref<64x128xf32, #tpu.memory_space<any>> -> memref<1x128xf32, #tpu.memory_space<any>>
      %c0_i32_19 = arith.constant 0 : i32
      %c0_i32_20 = arith.constant 0 : i32
      %19 = tpu.memref_slice %arg8[%c0_i32_19, %c0_i32_20] : memref<16x128xf32, #tpu.memory_space<vmem>> -> memref<1x128xf32, #tpu.memory_space<vmem>>
      tpu.wait_dma2 semaphore(%arg9 : memref<!tpu.dma_semaphore, #tpu.memory_space<semaphore_mem>>) src(%18 : memref<1x128xf32, #tpu.memory_space<any>>) dst(%19 : memref<1x128xf32, #tpu.memory_space<vmem>>)
    }
    %c0 = arith.constant 0 : index
    %c0_5 = arith.constant 0 : index
    %3 = vector.load %arg8[%c0, %c0_5] : memref<16x128xf32, #tpu.memory_space<vmem>>, vector<16x128xf32>
    %4 = arith.truncf %3 : vector<16x128xf32> to vector<16x128xbf16>
    %c0_6 = arith.constant 0 : index
    %c0_7 = arith.constant 0 : index
    %5 = vector.load %arg3[%c0_6, %c0_7] : memref<128x128xbf16, #tpu.memory_space<vmem>>, vector<128x128xbf16>
    %cst = arith.constant dense<0.000000e+00> : vector<16x128xf32>
    %6 = tpu.matmul %4, %5, %cst {dimension_numbers = #tpu.dot_dimension_numbers<[1], [0], [0], [1], [0, 0, 1, 1], [], []>} : vector<16x128xbf16>, vector<128x128xbf16>, vector<16x128xf32> -> vector<16x128xf32>
    %c0_8 = arith.constant 0 : index
    %c0_9 = arith.constant 0 : index
    %7 = vector.load %arg4[%c0_8, %c0_9] : memref<1x128xf32, #tpu.memory_space<vmem>>, vector<1x128xf32>
    %8 = vector.broadcast %7 : vector<1x128xf32> to vector<16x128xf32>
    %9 = arith.addf %6, %8 : vector<16x128xf32>
    %10 = math.tanh %9 : vector<16x128xf32>
    %11 = arith.truncf %10 : vector<16x128xf32> to vector<16x128xbf16>
    %c0_10 = arith.constant 0 : index
    %c0_11 = arith.constant 0 : index
    %12 = vector.load %arg5[%c0_10, %c0_11] : memref<128x128xbf16, #tpu.memory_space<vmem>>, vector<128x128xbf16>
    %cst_12 = arith.constant dense<0.000000e+00> : vector<16x128xf32>
    %13 = tpu.matmul %11, %12, %cst_12 {dimension_numbers = #tpu.dot_dimension_numbers<[1], [0], [0], [1], [0, 0, 1, 1], [], []>} : vector<16x128xbf16>, vector<128x128xbf16>, vector<16x128xf32> -> vector<16x128xf32>
    %c0_13 = arith.constant 0 : index
    %c0_14 = arith.constant 0 : index
    %14 = vector.load %arg6[%c0_13, %c0_14] : memref<1x128xf32, #tpu.memory_space<vmem>>, vector<1x128xf32>
    %15 = vector.broadcast %14 : vector<1x128xf32> to vector<16x128xf32>
    %16 = arith.addf %13, %15 : vector<16x128xf32>
    %c0_15 = arith.constant 0 : index
    %c0_16 = arith.constant 0 : index
    %17 = vector.load %arg7[%c0_15, %c0_16] : memref<16x128xf32, #tpu.memory_space<vmem>>, vector<16x128xf32>
    tpu.vector_store %arg7[%c0_15, %c0_16], %16 {strides = array<i32>} : memref<16x128xf32, #tpu.memory_space<vmem>>, vector<16x128xf32>,
    return
  }
  func.func @transform_1(%arg0: i32, %arg1: memref<16xi32, #tpu.memory_space<smem>>) -> (i32, i32) {
    %c0_i32 = arith.constant 0 : i32
    %c0_i32_0 = arith.constant 0 : i32
    %c0_i32_1 = arith.constant 0 : i32
    return %c0_i32, %c0_i32_0 : i32, i32
  }
  func.func @transform_2(%arg0: i32, %arg1: memref<16xi32, #tpu.memory_space<smem>>) -> (i32, i32) {
    %c0_i32 = arith.constant 0 : i32
    %c0_i32_0 = arith.constant 0 : i32
    %c0_i32_1 = arith.constant 0 : i32
    return %c0_i32, %c0_i32_0 : i32, i32
  }
  func.func @transform_3(%arg0: i32, %arg1: memref<16xi32, #tpu.memory_space<smem>>) -> (i32, i32) {
    %c0_i32 = arith.constant 0 : i32
    %c0_i32_0 = arith.constant 0 : i32
    %c0_i32_1 = arith.constant 0 : i32
    return %c0_i32, %c0_i32_0 : i32, i32
  }
  func.func @transform_4(%arg0: i32, %arg1: memref<16xi32, #tpu.memory_space<smem>>) -> (i32, i32) {
    %c0_i32 = arith.constant 0 : i32
    %c0_i32_0 = arith.constant 0 : i32
    %c0_i32_1 = arith.constant 0 : i32
    return %c0_i32, %c0_i32_0 : i32, i32
  }
  func.func @transform_5(%arg0: i32, %arg1: memref<16xi32, #tpu.memory_space<smem>>) -> (i32, i32) {
    %c0_i32 = arith.constant 0 : i32
    %c0_i32_0 = arith.constant 0 : i32
    return %arg0, %c0_i32 : i32, i32
  }
}

</mosaic_0001>

<llo_original>
// kernel: tpu_custom_call.1
$region0: #{tpu_custom_call.1}
  #allocation0 [shape = 'u32[]', space=smem, size = 0x4, offset = 0x4, fixed_abs, tag = 'smem constant byte address 0x4 - core index']
  #allocation1 [shape = 'u32[144,128]{1,0:T(1,128)}', space=vmem, size = 0x12000, scoped, tag = 'internal scratch']
  #allocation2 [shape = 'f32[16,128]{1,0:T(8,128)}', space=vmem, size = 0x2000, scoped, tag = 'scratch operand']
  #allocation3 [shape = 's32[1]{0}', space=sflag, size = 0x4, scoped, tag = 'scratch operand']
  #allocation4 [shape = 's32[1]{0}', space=sflag, size = 0x4, scoped, tag = 'scoped memory for tpu_custom_call.1']
  #allocation5 [shape = 'u8[512]{0}', space=smem, size = 0x200, scoped, tag = 'prefetched SMEM operand 0']
  #allocation12 [shape = 's32[]', space=sflag, size = 0x4, offset = 0, fixed_abs, tag = 'sflag constant byte address 0x0 - dummy sync flag']
  #allocation13 [shape = 's32[]', space=sflag, size = 0x4, offset = 0, fixed_abs, tag = 'sflag constant byte address 0x0 - dummy sync flag']
  #allocation14 [shape = 'u32[]', space=smem, size = 0x4, offset = 0x44, fixed_abs, tag = 'smem constant byte address 0x44 - assertion arg 0']
  #allocation15 [shape = 'u32[]', space=smem, size = 0x4, offset = 0x48, fixed_abs, tag = 'smem constant byte address 0x48 - assertion arg 1']
  %s0 = inlined_call_operand.hbm [shape: s32[16], index: 0, kind: input, shape index: {}]
  %s1 = inlined_call_operand.hbm [shape: f32[64,128], index: 1, kind: input, shape index: {}]
  %s2 = inlined_call_operand.hbm [shape: bf16[128,128], index: 2, kind: input, shape index: {}]
  %s3 = inlined_call_operand.vmem [shape: f32[1,128], index: 3, kind: input, shape index: {}]
  %s4 = inlined_call_operand.hbm [shape: bf16[128,128], index: 4, kind: input, shape index: {}]
  %s5 = inlined_call_operand.vmem [shape: f32[1,128], index: 5, kind: input, shape index: {}]
  %s6 = inlined_call_operand.hbm [shape: f32[16,128], index: 6, kind: output, shape index: {}]
  %s7 = sld [smem:[#allocation0]]
  $region52: #{tpu_custom_call.1} parent=0
    _
  %s9 = ssub.s32 1, %s7
  %s10 = scalar_select 0, %s9, %s7
  %12 = dma.hbm_to_smem %s0, 16, [#allocation5], [#allocation4]
  %13 = dma.done [#allocation4], 16
  %14 = sfence
  $region1: #{tpu_custom_call.1} parent=0
    #allocation6 [shape = 'u8[32768]{0}', space=vmem, size = 0x8000, scoped, tag = 'input window, operand 2, single buffered']
    #allocation7 [shape = 's32[1]{0}', space=sflag, size = 0x4, scoped, tag = 'scoped memory for tpu_custom_call.1']
    #allocation8 [shape = 's32[1]{0}', space=sflag, size = 0x4, scoped, tag = 'scoped memory for tpu_custom_call.1']
    #allocation9 [shape = 'u8[32768]{0}', space=vmem, size = 0x8000, scoped, tag = 'input window, operand 4, single buffered']
    #allocation10 [shape = 's32[1]{0}', space=sflag, size = 0x4, scoped, tag = 'scoped memory for tpu_custom_call.1']
    #allocation11 [shape = 'u8[8192]{0}', space=vmem, size = 0x2000, scoped, tag = 'output window, operand 0, single buffered']
    %15 = vsyncpa [#allocation7], 0
    %16 = vsyncpa [#allocation10], 0
    %17 = vsyncpa [#allocation8], 0
    // Predicated region
    $region2: #{tpu_custom_call.1} parent=1 // pred_check
      _
    $region3: #{tpu_custom_call.1} parent=1 // pred_check_branch
      %19 = sbr.rel (0) target = $region5
    $region4: #{tpu_custom_call.1} parent=1 // pred_region
      %s21 = ssub.s32 1024, 1024
      %22 = vsyncadd [#allocation7], %s21
      %s23 = sshll.u32 [#allocation6], 4
      %s24 = int_to_ptr.vmem [resolvable:$true] %s23
      %29 = dma.hbm_to_vmem [thread:$0]  %s2, 1024, %s24, [#allocation7], 64, 64, 4
    $region5: #{tpu_custom_call.1} parent=1 // pred_fallthru
      _
    // Predicated region
    $region6: #{tpu_custom_call.1} parent=1 // pred_check
      _
    $region7: #{tpu_custom_call.1} parent=1 // pred_check_branch
      %31 = sbr.rel (0) target = $region9
    $region8: #{tpu_custom_call.1} parent=1 // pred_region
      _
    $region9: #{tpu_custom_call.1} parent=1 // pred_fallthru
      _
    // Predicated region
    $region10: #{tpu_custom_call.1} parent=1 // pred_check
      _
    $region11: #{tpu_custom_call.1} parent=1 // pred_check_branch
      %33 = sbr.rel (0) target = $region13
    $region12: #{tpu_custom_call.1} parent=1 // pred_region
      %s35 = ssub.s32 1024, 1024
      %36 = vsyncadd [#allocation10], %s35
      %s37 = sshll.u32 [#allocation9], 4
      %s38 = int_to_ptr.vmem [resolvable:$true] %s37
      %43 = dma.hbm_to_vmem [thread:$0]  %s4, 1024, %s38, [#allocation10], 64, 64, 4
    $region13: #{tpu_custom_call.1} parent=1 // pred_fallthru
      _
    // Predicated region
    $region14: #{tpu_custom_call.1} parent=1 // pred_check
      _
    $region15: #{tpu_custom_call.1} parent=1 // pred_check_branch
      %45 = sbr.rel (0) target = $region17
    $region16: #{tpu_custom_call.1} parent=1 // pred_region
      _
    $region17: #{tpu_custom_call.1} parent=1 // pred_fallthru
      _
    // Predicated region
    $region18: #{tpu_custom_call.1} parent=1 // pred_check
      _
    $region19: #{tpu_custom_call.1} parent=1 // pred_check_branch
      %47 = sbr.rel (0) target = $region21
    $region20: #{tpu_custom_call.1} parent=1 // pred_region
      %48 = dma.done [#allocation7], 1024
    $region21: #{tpu_custom_call.1} parent=1 // pred_fallthru
      _
    // Predicated region
    $region22: #{tpu_custom_call.1} parent=1 // pred_check
      _
    $region23: #{tpu_custom_call.1} parent=1 // pred_check_branch
      %50 = sbr.rel (0) target = $region25
    $region24: #{tpu_custom_call.1} parent=1 // pred_region
      %51 = dma.done [#allocation10], 1024
    $region25: #{tpu_custom_call.1} parent=1 // pred_fallthru
      _
    %s53 = smul.u32 0, 16
    loop: start=0, step=1, limit=16
    $region26: #{tpu_custom_call.1} parent=1 // loop_pre_header
      _
    $region27: #{tpu_custom_call.1} parent=1 // loop_header
      %s55 = sphi 0, %s59
      %p56 = scmp.ge.s32.totalorder %s55, 16
    $region28: #{tpu_custom_call.1} parent=1 // loop_header_branch
      %58 = sbr.rel (%p56) target = $region32
    $region29: #{tpu_custom_call.1} parent=1 // loop_body
      %s60 = sadd.s32 %s53, %s55
      %s61 = sld [smem:[#allocation5 + %s60]]
      %s62 = smul.addr %s61, 16
      %s63 = scalar_lea.hbm %s1, %s62
      %s64 = scalar_lea.vmem [#allocation2], %s55
      // Predicated region
      $region33: #{tpu_custom_call.1} parent=29 // pred_check
        _
      $region34: #{tpu_custom_call.1} parent=29 // pred_check_branch
        %66 = sbr.rel target = $region36
      $region35: #{tpu_custom_call.1} parent=29 // pred_region
        %67 = sst [smem:[#allocation14]] [#allocation13]
        %68 = sst [smem:[#allocation15]] [#allocation12]
      $region36: #{tpu_custom_call.1} parent=29 // pred_fallthru
        _
      %70 = shalt.err (0)
      %s72 = sshll.u32 %s64, 4
      %s73 = int_to_ptr.vmem [resolvable:$true] %s72
      %75 = dma.hbm_to_vmem [thread:$0]  %s63, 16, %s73, [#allocation3]
    $region30: #{tpu_custom_call.1} parent=1 // loop_footer
      %s59 = sadd.s32 1, %s55
    $region31: #{tpu_custom_call.1} parent=1 // loop_footer_branch
      %54 = sbr.rel target = $region27
    $region32: #{tpu_custom_call.1} parent=1 // loop_exit
      _
    loop: start=0, step=1, limit=16
    $region37: #{tpu_custom_call.1} parent=1 // loop_pre_header
      _
    $region38: #{tpu_custom_call.1} parent=1 // loop_header
      %s77 = sphi 0, %s81
      %p78 = scmp.ge.s32.totalorder %s77, 16
    $region39: #{tpu_custom_call.1} parent=1 // loop_header_branch
      %80 = sbr.rel (%p78) target = $region43
    $region40: #{tpu_custom_call.1} parent=1 // loop_body
      %s82 = smul.u32 1, 1
      %s83 = sshll.u32 %s82, 4
      %84 = dma.done [#allocation3], %s83
    $region41: #{tpu_custom_call.1} parent=1 // loop_footer
      %s81 = sadd.s32 1, %s77
    $region42: #{tpu_custom_call.1} parent=1 // loop_footer_branch
      %76 = sbr.rel target = $region38
    $region43: #{tpu_custom_call.1} parent=1 // loop_exit
      _
    %v85 = vld [vmem:[#allocation2] sm:$0xff]
    %v86 = vld [vmem:[#allocation2 + $0x8] sm:$0xff]
    %v87 = vpack.c.bf16 %v86, %v85
    %v88 = vld [vmem:[#allocation6] sm:$0xf]
    %v89 = vld [vmem:[#allocation6 + $0x4] sm:$0xf]
    %v90 = vld [vmem:[#allocation6 + $0x8] sm:$0xf]
    %v91 = vld [vmem:[#allocation6 + $0xc] sm:$0xf]
    %v92 = vld [vmem:[#allocation6 + $0x10] sm:$0xf]
    %v93 = vld [vmem:[#allocation6 + $0x14] sm:$0xf]
    %v94 = vld [vmem:[#allocation6 + $0x18] sm:$0xf]
    %v95 = vld [vmem:[#allocation6 + $0x1c] sm:$0xf]
    %v96 = vld [vmem:[#allocation6 + $0x20] sm:$0xf]
    %v97 = vld [vmem:[#allocation6 + $0x24] sm:$0xf]
    %v98 = vld [vmem:[#allocation6 + $0x28] sm:$0xf]
    %v99 = vld [vmem:[#allocation6 + $0x2c] sm:$0xf]
    %v100 = vld [vmem:[#allocation6 + $0x30] sm:$0xf]
    %v101 = vld [vmem:[#allocation6 + $0x34] sm:$0xf]
    %v102 = vld [vmem:[#allocation6 + $0x38] sm:$0xf]
    %v103 = vld [vmem:[#allocation6 + $0x3c] sm:$0xf]
    %v104 = vld [vmem:[%s3] sm:$0x1]
    %v106 = vlaneseq
    %v107 = vshrl.u32 %v106, 7
    %v108 = vsub.s32 0, %v107
    %v109 = vrot.slane %v104, %v108
    %v127 = vunpack.c.l.b16 %v88
    %v128 = vunpack.c.l.b16 %v89
    %v129 = vunpack.c.l.b16 %v90
    %v130 = vunpack.c.l.b16 %v91
    %v131 = vunpack.c.l.b16 %v92
    %v132 = vunpack.c.l.b16 %v93
    %v133 = vunpack.c.l.b16 %v94
    %v134 = vunpack.c.l.b16 %v95
    %v135 = vunpack.c.l.b16 %v96
    %v136 = vunpack.c.l.b16 %v97
    %v137 = vunpack.c.l.b16 %v98
    %v138 = vunpack.c.l.b16 %v99
    %v139 = vunpack.c.l.b16 %v100
    %v140 = vunpack.c.l.b16 %v101
    %v141 = vunpack.c.l.b16 %v102
    %v142 = vunpack.c.l.b16 %v103
    %v143 = vpack.c.b16 %v128, %v127
    %v144 = vpack.c.b16 %v130, %v129
    %v145 = vpack.c.b16 %v132, %v131
    %v146 = vpack.c.b16 %v134, %v133
    %v147 = vpack.c.b16 %v136, %v135
    %v148 = vpack.c.b16 %v138, %v137
    %v149 = vpack.c.b16 %v140, %v139
    %v150 = vpack.c.b16 %v142, %v141
    %159 = vmatprep.subr.bf16.mxu0 0
    %160 = vmatpush1.bf16.msra.mxu0 %v150
    %161 = vmatprep.subr.bf16.mxu0 0
    %162 = vmatpush1.bf16.msra.mxu0 %v149
    %163 = vmatprep.subr.bf16.mxu0 0
    %164 = vmatpush1.bf16.msra.mxu0 %v148
    %165 = vmatprep.subr.bf16.mxu0 0
    %166 = vmatpush1.bf16.msra.mxu0 %v147
    %167 = vmatprep.subr.bf16.mxu0 0
    %168 = vmatpush1.bf16.msra.mxu0 %v146
    %169 = vmatprep.subr.bf16.mxu0 0
    %170 = vmatpush1.bf16.msra.mxu0 %v145
    %171 = vmatprep.subr.bf16.mxu0 0
    %172 = vmatpush1.bf16.msra.mxu0 %v144
    %173 = vmatprep.subr.bf16.mxu0 0
    %174 = vmatpush1.bf16.msra.mxu0 %v143
    %175 = vmatprep.subr.bf16.mxu0 0
    %176 = vmatpush2.bf16.msra.mxu0 0
    %177 = vmatprep.subr.bf16.mxu0 0
    %178 = vmatpush2.bf16.msra.mxu0 0
    %179 = vmatprep.subr.bf16.mxu0 0
    %180 = vmatpush2.bf16.msra.mxu0 0
    %181 = vmatprep.subr.bf16.mxu0 0
    %182 = vmatpush2.bf16.msra.mxu0 0
    %183 = vmatprep.subr.bf16.mxu0 0
    %184 = vmatpush2.bf16.msra.mxu0 0
    %185 = vmatprep.subr.bf16.mxu0 0
    %186 = vmatpush2.bf16.msra.mxu0 0
    %187 = vmatprep.subr.bf16.mxu0 0
    %188 = vmatpush2.bf16.msra.mxu0 0
    %189 = vmatprep.subr.bf16.mxu0 0
    %190 = vmatpush2.bf16.msra.mxu0 0
    %191 = vmatprep.mubr.bf16.mxu0 0
    %192 = vmatmul.mubr.bf16.gmra.mxu0 %v87
    %v193 = vpop.f32.mrf.mxu0
    %v194 = vadd.f32 %v109, %v193
    %v195 = vpop.f32.mrf.mxu0
    %v196 = vpop.f32.mrf.mxu0
    %v197 = vadd.f32 %v109, %v196
    %v198 = vpop.f32.mrf.mxu0
    %199 = vdwg.mxu0
    %v200 = vtanh.pop %v194
    %v201 = vtanh.pop %v197
    %v202 = vpack.c.bf16 %v201, %v200
    %v203 = vld [vmem:[#allocation9] sm:$0xf]
    %v204 = vld [vmem:[#allocation9 + $0x4] sm:$0xf]
    %v205 = vld [vmem:[#allocation9 + $0x8] sm:$0xf]
    %v206 = vld [vmem:[#allocation9 + $0xc] sm:$0xf]
    %v207 = vld [vmem:[#allocation9 + $0x10] sm:$0xf]
    %v208 = vld [vmem:[#allocation9 + $0x14] sm:$0xf]
    %v209 = vld [vmem:[#allocation9 + $0x18] sm:$0xf]
    %v210 = vld [vmem:[#allocation9 + $0x1c] sm:$0xf]
    %v211 = vld [vmem:[#allocation9 + $0x20] sm:$0xf]
    %v212 = vld [vmem:[#allocation9 + $0x24] sm:$0xf]
    %v213 = vld [vmem:[#allocation9 + $0x28] sm:$0xf]
    %v214 = vld [vmem:[#allocation9 + $0x2c] sm:$0xf]
    %v215 = vld [vmem:[#allocation9 + $0x30] sm:$0xf]
    %v216 = vld [vmem:[#allocation9 + $0x34] sm:$0xf]
    %v217 = vld [vmem:[#allocation9 + $0x38] sm:$0xf]
    %v218 = vld [vmem:[#allocation9 + $0x3c] sm:$0xf]
    %v219 = vld [vmem:[%s5] sm:$0x1]
    %v221 = vlaneseq
    %v222 = vshrl.u32 %v221, 7
    %v223 = vsub.s32 0, %v222
    %v224 = vrot.slane %v219, %v223
    %v242 = vunpack.c.l.b16 %v203
    %v243 = vunpack.c.l.b16 %v204
    %v244 = vunpack.c.l.b16 %v205
    %v245 = vunpack.c.l.b16 %v206
    %v246 = vunpack.c.l.b16 %v207
    %v247 = vunpack.c.l.b16 %v208
    %v248 = vunpack.c.l.b16 %v209
    %v249 = vunpack.c.l.b16 %v210
    %v250 = vunpack.c.l.b16 %v211
    %v251 = vunpack.c.l.b16 %v212
    %v252 = vunpack.c.l.b16 %v213
    %v253 = vunpack.c.l.b16 %v214
    %v254 = vunpack.c.l.b16 %v215
    %v255 = vunpack.c.l.b16 %v216
    %v256 = vunpack.c.l.b16 %v217
    %v257 = vunpack.c.l.b16 %v218
    %v258 = vpack.c.b16 %v243, %v242
    %v259 = vpack.c.b16 %v245, %v244
    %v260 = vpack.c.b16 %v247, %v246
    %v261 = vpack.c.b16 %v249, %v248
    %v262 = vpack.c.b16 %v251, %v250
    %v263 = vpack.c.b16 %v253, %v252
    %v264 = vpack.c.b16 %v255, %v254
    %v265 = vpack.c.b16 %v257, %v256
    %274 = vmatprep.subr.bf16.mxu0 0
    %275 = vmatpush1.bf16.msra.mxu0 %v265
    %276 = vmatprep.subr.bf16.mxu0 0
    %277 = vmatpush1.bf16.msra.mxu0 %v264
    %278 = vmatprep.subr.bf16.mxu0 0
    %279 = vmatpush1.bf16.msra.mxu0 %v263
    %280 = vmatprep.subr.bf16.mxu0 0
    %281 = vmatpush1.bf16.msra.mxu0 %v262
    %282 = vmatprep.subr.bf16.mxu0 0
    %283 = vmatpush1.bf16.msra.mxu0 %v261
    %284 = vmatprep.subr.bf16.mxu0 0
    %285 = vmatpush1.bf16.msra.mxu0 %v260
    %286 = vmatprep.subr.bf16.mxu0 0
    %287 = vmatpush1.bf16.msra.mxu0 %v259
    %288 = vmatprep.subr.bf16.mxu0 0
    %289 = vmatpush1.bf16.msra.mxu0 %v258
    %290 = vmatprep.subr.bf16.mxu0 0
    %291 = vmatpush2.bf16.msra.mxu0 0
    %292 = vmatprep.subr.bf16.mxu0 0
    %293 = vmatpush2.bf16.msra.mxu0 0
    %294 = vmatprep.subr.bf16.mxu0 0
    %295 = vmatpush2.bf16.msra.mxu0 0
    %296 = vmatprep.subr.bf16.mxu0 0
    %297 = vmatpush2.bf16.msra.mxu0 0
    %298 = vmatprep.subr.bf16.mxu0 0
    %299 = vmatpush2.bf16.msra.mxu0 0
    %300 = vmatprep.subr.bf16.mxu0 0
    %301 = vmatpush2.bf16.msra.mxu0 0
    %302 = vmatprep.subr.bf16.mxu0 0
    %303 = vmatpush2.bf16.msra.mxu0 0
    %304 = vmatprep.subr.bf16.mxu0 0
    %305 = vmatpush2.bf16.msra.mxu0 0
    %306 = vmatprep.mubr.bf16.mxu0 0
    %307 = vmatmul.mubr.bf16.gmra.mxu0 %v202
    %v308 = vpop.f32.mrf.mxu0
    %v309 = vadd.f32 %v224, %v308
    %v310 = vpop.f32.mrf.mxu0
    %v311 = vpop.f32.mrf.mxu0
    %v312 = vadd.f32 %v224, %v311
    %v313 = vpop.f32.mrf.mxu0
    %314 = vdwg.mxu0
    %315 = vst [vmem:[#allocation11] sm:$0xff] %v309
    %316 = vst [vmem:[#allocation11 + $0x8] sm:$0xff] %v312
    // Predicated region
    $region44: #{tpu_custom_call.1} parent=1 // pred_check
      _
    $region45: #{tpu_custom_call.1} parent=1 // pred_check_branch
      %318 = sbr.rel (0) target = $region47
    $region46: #{tpu_custom_call.1} parent=1 // pred_region
      %s320 = ssub.s32 256, 256
      %321 = vsyncadd [#allocation8], %s320
      %s322 = sshll.u32 [#allocation11], 4
      %s323 = int_to_ptr.vmem [resolvable:$true] %s322
      %328 = dma.vmem_to_hbm [thread:$0]  %s323, 256, %s6, [#allocation8], 128, 128, 8
    $region47: #{tpu_custom_call.1} parent=1 // pred_fallthru
      _
    // Predicated region
    $region48: #{tpu_custom_call.1} parent=1 // pred_check
      _
    $region49: #{tpu_custom_call.1} parent=1 // pred_check_branch
      %330 = sbr.rel (0) target = $region51
    $region50: #{tpu_custom_call.1} parent=1 // pred_region
      %331 = dma.done [#allocation8], 256
    $region51: #{tpu_custom_call.1} parent=1 // pred_fallthru
      _
    %332 = vsyncpa [#allocation7], 1
    %333 = vsyncpa [#allocation10], 1
    %334 = vsyncpa [#allocation8], 1
  %335 = vsyncmov [#allocation3]
  %s336 = vpop.sfrf %335
  %p337 = scmp.eq.s32.totalorder %s336, 0
  %p338 = pneg %p337
  %340 = shalt.err (%p338)

// kernel: tpu_custom_call.1
$region0: #{tpu_custom_call.1}
  #allocation0 [shape = 'u32[]', space=smem, size = 0x4, offset = 0x4, fixed_abs, tag = 'smem constant byte address 0x4 - core index']
  #allocation1 [shape = 'u32[144,128]{1,0:T(1,128)}', space=vmem, size = 0x12000, scoped, tag = 'internal scratch']
  #allocation2 [shape = 'f32[16,128]{1,0:T(8,128)}', space=vmem, size = 0x2000, scoped, tag = 'scratch operand']
  #allocation3 [shape = 's32[1]{0}', space=sflag, size = 0x4, scoped, tag = 'scratch operand']
  #allocation4 [shape = 's32[1]{0}', space=sflag, size = 0x4, scoped, tag = 'scoped memory for tpu_custom_call.1']
  #allocation5 [shape = 'u8[512]{0}', space=smem, size = 0x200, scoped, tag = 'prefetched SMEM operand 0']
  #allocation12 [shape = 's32[]', space=sflag, size = 0x4, offset = 0, fixed_abs, tag = 'sflag constant byte address 0x0 - dummy sync flag']
  #allocation13 [shape = 's32[]', space=sflag, size = 0x4, offset = 0, fixed_abs, tag = 'sflag constant byte address 0x0 - dummy sync flag']
  #allocation14 [shape = 'u32[]', space=smem, size = 0x4, offset = 0x44, fixed_abs, tag = 'smem constant byte address 0x44 - assertion arg 0']
  #allocation15 [shape = 'u32[]', space=smem, size = 0x4, offset = 0x48, fixed_abs, tag = 'smem constant byte address 0x48 - assertion arg 1']
  %s0 = inlined_call_operand.hbm [shape: s32[16], index: 0, kind: input, shape index: {}]
  %s1 = inlined_call_operand.hbm [shape: f32[64,128], index: 1, kind: input, shape index: {}]
  %s2 = inlined_call_operand.hbm [shape: bf16[128,128], index: 2, kind: input, shape index: {}]
  %s3 = inlined_call_operand.vmem [shape: f32[1,128], index: 3, kind: input, shape index: {}]
  %s4 = inlined_call_operand.hbm [shape: bf16[128,128], index: 4, kind: input, shape index: {}]
  %s5 = inlined_call_operand.vmem [shape: f32[1,128], index: 5, kind: input, shape index: {}]
  %s6 = inlined_call_operand.hbm [shape: f32[16,128], index: 6, kind: output, shape index: {}]
  %s7 = sld [smem:[#allocation0]]
  $region52: #{tpu_custom_call.1} parent=0
    _
  %s9 = ssub.s32 1, %s7
  %s10 = scalar_select 0, %s9, %s7
  %12 = dma.hbm_to_smem %s0, 16, [#allocation5], [#allocation4]
  %13 = dma.done [#allocation4], 16
  %14 = sfence
  $region1: #{tpu_custom_call.1} parent=0
    #allocation6 [shape = 'u8[32768]{0}', space=vmem, size = 0x8000, scoped, tag = 'input window, operand 2, single buffered']
    #allocation7 [shape = 's32[1]{0}', space=sflag, size = 0x4, scoped, tag = 'scoped memory for tpu_custom_call.1']
    #allocation8 [shape = 's32[1]{0}', space=sflag, size = 0x4, scoped, tag = 'scoped memory for tpu_custom_call.1']
    #allocation9 [shape = 'u8[32768]{0}', space=vmem, size = 0x8000, scoped, tag = 'input window, operand 4, single buffered']
    #allocation10 [shape = 's32[1]{0}', space=sflag, size = 0x4, scoped, tag = 'scoped memory for tpu_custom_call.1']
    #allocation11 [shape = 'u8[8192]{0}', space=vmem, size = 0x2000, scoped, tag = 'output window, operand 0, single buffered']
    %15 = vsyncpa [#allocation7], 0
    %16 = vsyncpa [#allocation10], 0
    %17 = vsyncpa [#allocation8], 0
    // Predicated region
    $region2: #{tpu_custom_call.1} parent=1 // pred_check
      _
    $region3: #{tpu_custom_call.1} parent=1 // pred_check_branch
      %19 = sbr.rel (0) target = $region5
    $region4: #{tpu_custom_call.1} parent=1 // pred_region
      %s21 = ssub.s32 1024, 1024
      %22 = vsyncadd [#allocation7], %s21
      %s23 = sshll.u32 [#allocation6], 4
      %s24 = int_to_ptr.vmem [resolvable:$true] %s23
      %29 = dma.hbm_to_vmem [thread:$0]  %s2, 1024, %s24, [#allocation7], 64, 64, 4
    $region5: #{tpu_custom_call.1} parent=1 // pred_fallthru
      _
    // Predicated region
    $region6: #{tpu_custom_call.1} parent=1 // pred_check
      _
    $region7: #{tpu_custom_call.1} parent=1 // pred_check_branch
      %31 = sbr.rel (0) target = $region9
    $region8: #{tpu_custom_call.1} parent=1 // pred_region
      _
    $region9: #{tpu_custom_call.1} parent=1 // pred_fallthru
      _
    // Predicated region
    $region10: #{tpu_custom_call.1} parent=1 // pred_check
      _
    $region11: #{tpu_custom_call.1} parent=1 // pred_check_branch
      %33 = sbr.rel (0) target = $region13
    $region12: #{tpu_custom_call.1} parent=1 // pred_region
      %s35 = ssub.s32 1024, 1024
      %36 = vsyncadd [#allocation10], %s35
      %s37 = sshll.u32 [#allocation9], 4
      %s38 = int_to_ptr.vmem [resolvable:$true] %s37
      %43 = dma.hbm_to_vmem [thread:$0]  %s4, 1024, %s38, [#allocation10], 64, 64, 4
    $region13: #{tpu_custom_call.1} parent=1 // pred_fallthru
      _
    // Predicated region
    $region14: #{tpu_custom_call.1} parent=1 // pred_check
      _
    $region15: #{tpu_custom_call.1} parent=1 // pred_check_branch
      %45 = sbr.rel (0) target = $region17
    $region16: #{tpu_custom_call.1} parent=1 // pred_region
      _
    $region17: #{tpu_custom_call.1} parent=1 // pred_fallthru
      _
    // Predicated region
    $region18: #{tpu_custom_call.1} parent=1 // pred_check
      _
    $region19: #{tpu_custom_call.1} parent=1 // pred_check_branch
      %47 = sbr.rel (0) target = $region21
    $region20: #{tpu_custom_call.1} parent=1 // pred_region
      %48 = dma.done [#allocation7], 1024
    $region21: #{tpu_custom_call.1} parent=1 // pred_fallthru
      _
    // Predicated region
    $region22: #{tpu_custom_call.1} parent=1 // pred_check
      _
    $region23: #{tpu_custom_call.1} parent=1 // pred_check_branch
      %50 = sbr.rel (0) target = $region25
    $region24: #{tpu_custom_call.1} parent=1 // pred_region
      %51 = dma.done [#allocation10], 1024
    $region25: #{tpu_custom_call.1} parent=1 // pred_fallthru
      _
    %s53 = smul.u32 0, 16
    loop: start=0, step=1, limit=16
    $region26: #{tpu_custom_call.1} parent=1 // loop_pre_header
      _
    $region27: #{tpu_custom_call.1} parent=1 // loop_header
      %s55 = sphi 0, %s59
      %p56 = scmp.ge.s32.totalorder %s55, 16
    $region28: #{tpu_custom_call.1} parent=1 // loop_header_branch
      %58 = sbr.rel (%p56) target = $region32
    $region29: #{tpu_custom_call.1} parent=1 // loop_body
      %s60 = sadd.s32 %s53, %s55
      %s61 = sld [smem:[#allocation5 + %s60]]
      %s62 = smul.addr %s61, 16
      %s63 = scalar_lea.hbm %s1, %s62
      %s64 = scalar_lea.vmem [#allocation2], %s55
      // Predicated region
      $region33: #{tpu_custom_call.1} parent=29 // pred_check
        _
      $region34: #{tpu_custom_call.1} parent=29 // pred_check_branch
        %66 = sbr.rel target = $region36
      $region35: #{tpu_custom_call.1} parent=29 // pred_region
        %67 = sst [smem:[#allocation14]] [#allocation13]
        %68 = sst [smem:[#allocation15]] [#allocation12]
      $region36: #{tpu_custom_call.1} parent=29 // pred_fallthru
        _
      %70 = shalt.err (0)
      %s72 = sshll.u32 %s64, 4
      %s73 = int_to_ptr.vmem [resolvable:$true] %s72
      %75 = dma.hbm_to_vmem [thread:$0]  %s63, 16, %s73, [#allocation3]
    $region30: #{tpu_custom_call.1} parent=1 // loop_footer
      %s59 = sadd.s32 1, %s55
    $region31: #{tpu_custom_call.1} parent=1 // loop_footer_branch
      %54 = sbr.rel target = $region27
    $region32: #{tpu_custom_call.1} parent=1 // loop_exit
      _
    loop: start=0, step=1, limit=16
    $region37: #{tpu_custom_call.1} parent=1 // loop_pre_header
      _
    $region38: #{tpu_custom_call.1} parent=1 // loop_header
      %s77 = sphi 0, %s81
      %p78 = scmp.ge.s32.totalorder %s77, 16
    $region39: #{tpu_custom_call.1} parent=1 // loop_header_branch
      %80 = sbr.rel (%p78) target = $region43
    $region40: #{tpu_custom_call.1} parent=1 // loop_body
      %s82 = smul.u32 1, 1
      %s83 = sshll.u32 %s82, 4
      %84 = dma.done [#allocation3], %s83
    $region41: #{tpu_custom_call.1} parent=1 // loop_footer
      %s81 = sadd.s32 1, %s77
    $region42: #{tpu_custom_call.1} parent=1 // loop_footer_branch
      %76 = sbr.rel target = $region38
    $region43: #{tpu_custom_call.1} parent=1 // loop_exit
      _
    %v85 = vld [vmem:[#allocation2] sm:$0xff]
    %v86 = vld [vmem:[#allocation2 + $0x8] sm:$0xff]
    %v87 = vpack.c.bf16 %v86, %v85
    %v88 = vld [vmem:[#allocation6] sm:$0xf]
    %v89 = vld [vmem:[#allocation6 + $0x4] sm:$0xf]
    %v90 = vld [vmem:[#allocation6 + $0x8] sm:$0xf]
    %v91 = vld [vmem:[#allocation6 + $0xc] sm:$0xf]
    %v92 = vld [vmem:[#allocation6 + $0x10] sm:$0xf]
    %v93 = vld [vmem:[#allocation6 + $0x14] sm:$0xf]
    %v94 = vld [vmem:[#allocation6 + $0x18] sm:$0xf]
    %v95 = vld [vmem:[#allocation6 + $0x1c] sm:$0xf]
    %v96 = vld [vmem:[#allocation6 + $0x20] sm:$0xf]
    %v97 = vld [vmem:[#allocation6 + $0x24] sm:$0xf]
    %v98 = vld [vmem:[#allocation6 + $0x28] sm:$0xf]
    %v99 = vld [vmem:[#allocation6 + $0x2c] sm:$0xf]
    %v100 = vld [vmem:[#allocation6 + $0x30] sm:$0xf]
    %v101 = vld [vmem:[#allocation6 + $0x34] sm:$0xf]
    %v102 = vld [vmem:[#allocation6 + $0x38] sm:$0xf]
    %v103 = vld [vmem:[#allocation6 + $0x3c] sm:$0xf]
    %v104 = vld [vmem:[%s3] sm:$0x1]
    %v106 = vlaneseq
    %v107 = vshrl.u32 %v106, 7
    %v108 = vsub.s32 0, %v107
    %v109 = vrot.slane %v104, %v108
    %v127 = vunpack.c.l.b16 %v88
    %v128 = vunpack.c.l.b16 %v89
    %v129 = vunpack.c.l.b16 %v90
    %v130 = vunpack.c.l.b16 %v91
    %v131 = vunpack.c.l.b16 %v92
    %v132 = vunpack.c.l.b16 %v93
    %v133 = vunpack.c.l.b16 %v94
    %v134 = vunpack.c.l.b16 %v95
    %v135 = vunpack.c.l.b16 %v96
    %v136 = vunpack.c.l.b16 %v97
    %v137 = vunpack.c.l.b16 %v98
    %v138 = vunpack.c.l.b16 %v99
    %v139 = vunpack.c.l.b16 %v100
    %v140 = vunpack.c.l.b16 %v101
    %v141 = vunpack.c.l.b16 %v102
    %v142 = vunpack.c.l.b16 %v103
    %v143 = vpack.c.b16 %v128, %v127
    %v144 = vpack.c.b16 %v130, %v129
    %v145 = vpack.c.b16 %v132, %v131
    %v146 = vpack.c.b16 %v134, %v133
    %v147 = vpack.c.b16 %v136, %v135
    %v148 = vpack.c.b16 %v138, %v137
    %v149 = vpack.c.b16 %v140, %v139
    %v150 = vpack.c.b16 %v142, %v141
    %159 = vmatprep.subr.bf16.mxu0 0
    %160 = vmatpush1.bf16.msra.mxu0 %v150
    %161 = vmatprep.subr.bf16.mxu0 0
    %162 = vmatpush1.bf16.msra.mxu0 %v149
    %163 = vmatprep.subr.bf16.mxu0 0
    %164 = vmatpush1.bf16.msra.mxu0 %v148
    %165 = vmatprep.subr.bf16.mxu0 0
    %166 = vmatpush1.bf16.msra.mxu0 %v147
    %167 = vmatprep.subr.bf16.mxu0 0
    %168 = vmatpush1.bf16.msra.mxu0 %v146
    %169 = vmatprep.subr.bf16.mxu0 0
    %170 = vmatpush1.bf16.msra.mxu0 %v145
    %171 = vmatprep.subr.bf16.mxu0 0
    %172 = vmatpush1.bf16.msra.mxu0 %v144
    %173 = vmatprep.subr.bf16.mxu0 0
    %174 = vmatpush1.bf16.msra.mxu0 %v143
    %175 = vmatprep.subr.bf16.mxu0 0
    %176 = vmatpush2.bf16.msra.mxu0 0
    %177 = vmatprep.subr.bf16.mxu0 0
    %178 = vmatpush2.bf16.msra.mxu0 0
    %179 = vmatprep.subr.bf16.mxu0 0
    %180 = vmatpush2.bf16.msra.mxu0 0
    %181 = vmatprep.subr.bf16.mxu0 0
    %182 = vmatpush2.bf16.msra.mxu0 0
    %183 = vmatprep.subr.bf16.mxu0 0
    %184 = vmatpush2.bf16.msra.mxu0 0
    %185 = vmatprep.subr.bf16.mxu0 0
    %186 = vmatpush2.bf16.msra.mxu0 0
    %187 = vmatprep.subr.bf16.mxu0 0
    %188 = vmatpush2.bf16.msra.mxu0 0
    %189 = vmatprep.subr.bf16.mxu0 0
    %190 = vmatpush2.bf16.msra.mxu0 0
    %191 = vmatprep.mubr.bf16.mxu0 0
    %192 = vmatmul.mubr.bf16.gmra.mxu0 %v87
    %v193 = vpop.f32.mrf.mxu0
    %v194 = vadd.f32 %v109, %v193
    %v195 = vpop.f32.mrf.mxu0
    %v196 = vpop.f32.mrf.mxu0
    %v197 = vadd.f32 %v109, %v196
    %v198 = vpop.f32.mrf.mxu0
    %199 = vdwg.mxu0
    %v200 = vtanh.pop %v194
    %v201 = vtanh.pop %v197
    %v202 = vpack.c.bf16 %v201, %v200
    %v203 = vld [vmem:[#allocation9] sm:$0xf]
    %v204 = vld [vmem:[#allocation9 + $0x4] sm:$0xf]
    %v205 = vld [vmem:[#allocation9 + $0x8] sm:$0xf]
    %v206 = vld [vmem:[#allocation9 + $0xc] sm:$0xf]
    %v207 = vld [vmem:[#allocation9 + $0x10] sm:$0xf]
    %v208 = vld [vmem:[#allocation9 + $0x14] sm:$0xf]
    %v209 = vld [vmem:[#allocation9 + $0x18] sm:$0xf]
    %v210 = vld [vmem:[#allocation9 + $0x1c] sm:$0xf]
    %v211 = vld [vmem:[#allocation9 + $0x20] sm:$0xf]
    %v212 = vld [vmem:[#allocation9 + $0x24] sm:$0xf]
    %v213 = vld [vmem:[#allocation9 + $0x28] sm:$0xf]
    %v214 = vld [vmem:[#allocation9 + $0x2c] sm:$0xf]
    %v215 = vld [vmem:[#allocation9 + $0x30] sm:$0xf]
    %v216 = vld [vmem:[#allocation9 + $0x34] sm:$0xf]
    %v217 = vld [vmem:[#allocation9 + $0x38] sm:$0xf]
    %v218 = vld [vmem:[#allocation9 + $0x3c] sm:$0xf]
    %v219 = vld [vmem:[%s5] sm:$0x1]
    %v221 = vlaneseq
    %v222 = vshrl.u32 %v221, 7
    %v223 = vsub.s32 0, %v222
    %v224 = vrot.slane %v219, %v223
    %v242 = vunpack.c.l.b16 %v203
    %v243 = vunpack.c.l.b16 %v204
    %v244 = vunpack.c.l.b16 %v205
    %v245 = vunpack.c.l.b16 %v206
    %v246 = vunpack.c.l.b16 %v207
    %v247 = vunpack.c.l.b16 %v208
    %v248 = vunpack.c.l.b16 %v209
    %v249 = vunpack.c.l.b16 %v210
    %v250 = vunpack.c.l.b16 %v211
    %v251 = vunpack.c.l.b16 %v212
    %v252 = vunpack.c.l.b16 %v213
    %v253 = vunpack.c.l.b16 %v214
    %v254 = vunpack.c.l.b16 %v215
    %v255 = vunpack.c.l.b16 %v216
    %v256 = vunpack.c.l.b16 %v217
    %v257 = vunpack.c.l.b16 %v218
    %v258 = vpack.c.b16 %v243, %v242
    %v259 = vpack.c.b16 %v245, %v244
    %v260 = vpack.c.b16 %v247, %v246
    %v261 = vpack.c.b16 %v249, %v248
    %v262 = vpack.c.b16 %v251, %v250
    %v263 = vpack.c.b16 %v253, %v252
    %v264 = vpack.c.b16 %v255, %v254
    %v265 = vpack.c.b16 %v257, %v256
    %274 = vmatprep.subr.bf16.mxu0 0
    %275 = vmatpush1.bf16.msra.mxu0 %v265
    %276 = vmatprep.subr.bf16.mxu0 0
    %277 = vmatpush1.bf16.msra.mxu0 %v264
    %278 = vmatprep.subr.bf16.mxu0 0
    %279 = vmatpush1.bf16.msra.mxu0 %v263
    %280 = vmatprep.subr.bf16.mxu0 0
    %281 = vmatpush1.bf16.msra.mxu0 %v262
    %282 = vmatprep.subr.bf16.mxu0 0
    %283 = vmatpush1.bf16.msra.mxu0 %v261
    %284 = vmatprep.subr.bf16.mxu0 0
    %285 = vmatpush1.bf16.msra.mxu0 %v260
    %286 = vmatprep.subr.bf16.mxu0 0
    %287 = vmatpush1.bf16.msra.mxu0 %v259
    %288 = vmatprep.subr.bf16.mxu0 0
    %289 = vmatpush1.bf16.msra.mxu0 %v258
    %290 = vmatprep.subr.bf16.mxu0 0
    %291 = vmatpush2.bf16.msra.mxu0 0
    %292 = vmatprep.subr.bf16.mxu0 0
    %293 = vmatpush2.bf16.msra.mxu0 0
    %294 = vmatprep.subr.bf16.mxu0 0
    %295 = vmatpush2.bf16.msra.mxu0 0
    %296 = vmatprep.subr.bf16.mxu0 0
    %297 = vmatpush2.bf16.msra.mxu0 0
    %298 = vmatprep.subr.bf16.mxu0 0
    %299 = vmatpush2.bf16.msra.mxu0 0
    %300 = vmatprep.subr.bf16.mxu0 0
    %301 = vmatpush2.bf16.msra.mxu0 0
    %302 = vmatprep.subr.bf16.mxu0 0
    %303 = vmatpush2.bf16.msra.mxu0 0
    %304 = vmatprep.subr.bf16.mxu0 0
    %305 = vmatpush2.bf16.msra.mxu0 0
    %306 = vmatprep.mubr.bf16.mxu0 0
    %307 = vmatmul.mubr.bf16.gmra.mxu0 %v202
    %v308 = vpop.f32.mrf.mxu0
    %v309 = vadd.f32 %v224, %v308
    %v310 = vpop.f32.mrf.mxu0
    %v311 = vpop.f32.mrf.mxu0
    %v312 = vadd.f32 %v224, %v311
    %v313 = vpop.f32.mrf.mxu0
    %314 = vdwg.mxu0
    %315 = vst [vmem:[#allocation11] sm:$0xff] %v309
    %316 = vst [vmem:[#allocation11 + $0x8] sm:$0xff] %v312
    // Predicated region
    $region44: #{tpu_custom_call.1} parent=1 // pred_check
      _
    $region45: #{tpu_custom_call.1} parent=1 // pred_check_branch
      %318 = sbr.rel (0) target = $region47
    $region46: #{tpu_custom_call.1} parent=1 // pred_region
      %s320 = ssub.s32 256, 256
      %321 = vsyncadd [#allocation8], %s320
      %s322 = sshll.u32 [#allocation11], 4
      %s323 = int_to_ptr.vmem [resolvable:$true] %s322
      %328 = dma.vmem_to_hbm [thread:$0]  %s323, 256, %s6, [#allocation8], 128, 128, 8
    $region47: #{tpu_custom_call.1} parent=1 // pred_fallthru
      _
    // Predicated region
    $region48: #{tpu_custom_call.1} parent=1 // pred_check
      _
    $region49: #{tpu_custom_call.1} parent=1 // pred_check_branch
      %330 = sbr.rel (0) target = $region51
    $region50: #{tpu_custom_call.1} parent=1 // pred_region
      %331 = dma.done [#allocation8], 256
    $region51: #{tpu_custom_call.1} parent=1 // pred_fallthru
      _
    %332 = vsyncpa [#allocation7], 1
    %333 = vsyncpa [#allocation10], 1
    %334 = vsyncpa [#allocation8], 1
  %335 = vsyncmov [#allocation3]
  %s336 = vpop.sfrf %335
  %p337 = scmp.eq.s32.totalorder %s336, 0
  %p338 = pneg %p337
  %340 = shalt.err (%p338)

</llo_original>
